<compile_context>
chip_gen: v5e
topology: v5e:2x2
jax: 0.10.0
libtpu: 0.0.40
codegen_flags: <defaults>
</compile_context>

<pallas_src>
import functools

import jax
import jax.numpy as jnp
from jax.experimental import pallas as pl
from jax.experimental.pallas import tpu as pltpu


_SUBLANE = 8

_ACT_FNS = {
    "ReLU": lambda x: jnp.maximum(x, 0.0),
    "Tanh": jnp.tanh,
    "Sigmoid": jax.nn.sigmoid,
    "GELU": jax.nn.gelu,
}


def _round_up(n, m):
    return ((n + m - 1) // m) * m


def _is_multi_tensorcore_chip():
    """True on chips with 2 TensorCores per device (v7x)."""
    try:
        kind = jax.devices()[0].device_kind.lower()
    except Exception:
        return False
    return "v7" in kind


def _fused_mlp_kernel(*refs, act_names, use_bf16_matmul):
    """Entire Linear->act->...->Linear chain on one batch tile.

    refs = (x_ref, w0, b0, w1, b1, ..., wL, bL, o_ref).
    Intermediates stay in vregs/VMEM; only the final [tile, 1] output is stored.
    Bias add / activation are done in f32 (v5e has no bf16 VPU path).
    """
    x_ref = refs[0]
    o_ref = refs[-1]
    n_layers = len(act_names)

    h = x_ref[...]
    for i in range(n_layers):
        w = refs[1 + 2 * i][...]   # already bf16 if use_bf16_matmul (pre-cast at init)
        b = refs[2 + 2 * i][...]   # always f32
        if use_bf16_matmul:
            h = jnp.dot(h.astype(jnp.bfloat16), w, preferred_element_type=jnp.float32)
        else:
            h = jnp.dot(h, w, preferred_element_type=jnp.float32)
        h = h + b  # [1, out] broadcasts over rows, f32
        act = act_names[i]
        if act is not None:
            h = _ACT_FNS[act](h)
    o_ref[...] = h.astype(o_ref.dtype)


def fused_dense_forward(x, params, act_names, *, tile_m=4096, use_bf16_matmul=False):
    """Run the fused MLP. x: [batch, in_features] f32. Returns [batch, 1] f32."""
    batch, in_features = x.shape
    out_features = params[-1][0].shape[1]  # == 1 (no lane padding)

    # Tile selection:
    #  * whole batch fits one tile -> grid=(1,) with minimal sublane padding
    #    (e.g. batch=200 -> one 200-row step);
    #  * otherwise large batch tiles (default 4096 rows) so per-grid-step
    #    overhead (~0.35 us) is negligible vs. the ~tile*16*4 B of input DMA.
    if batch <= tile_m:
        tile = max(_SUBLANE, _round_up(batch, _SUBLANE))
    else:
        tile = _round_up(max(_SUBLANE, int(tile_m)), _SUBLANE)

    padded = _round_up(batch, tile)
    if padded != batch:
        x = jnp.pad(x, ((0, padded - batch), (0, 0)))
    num_tiles = padded // tile
    grid = (num_tiles,)

    # Weights/biases: full-array blocks, constant index_map -> resident in VMEM
    # across all batch tiles (no re-DMA per grid step).
    weight_specs = []
    flat_params = []
    for w, b in params:
        weight_specs.append(pl.BlockSpec(w.shape, lambda i: (0, 0)))
        weight_specs.append(pl.BlockSpec(b.shape, lambda i: (0, 0)))
        flat_params.extend([w, b])

    kernel = functools.partial(
        _fused_mlp_kernel,
        act_names=tuple(act_names),
        use_bf16_matmul=use_bf16_matmul,
    )

    # Real 2-TC split on v7x; plain "parallel" elsewhere (no-op but harmless).
    batch_sem = "parallel"
    if num_tiles >= 2 and _is_multi_tensorcore_chip():
        batch_sem = pltpu.CORE_PARALLEL

    out = pl.pallas_call(
        kernel,
        out_shape=jax.ShapeDtypeStruct((padded, out_features), jnp.float32),
        grid=grid,
        in_specs=[pl.BlockSpec((tile, in_features), lambda i: (i, 0))] + weight_specs,
        out_specs=pl.BlockSpec((tile, out_features), lambda i: (i, 0)),
        compiler_params=pltpu.CompilerParams(
            dimension_semantics=(batch_sem,),
        ),
    )(x, *flat_params)

    # Drop padded batch rows; output is already [*, 1].
    return out[:batch, :]


class DenseNNPallas:
    """Pallas implementation of DenseNN forward (eval-mode semantics)."""

    def __init__(self, in_features, hidden_layers, activations="ReLU",
                 dropout=0.0, seed=0, tile_m=4096, use_bf16_matmul=False):
        if isinstance(activations, list):
            if len(activations) != len(hidden_layers) - 1:
                raise ValueError(
                    "Length of activations should be one less than length of hidden_layers")
        else:
            assert isinstance(activations, str)
            activations = [activations] * (len(hidden_layers) - 1)
        for a in activations:
            if a not in _ACT_FNS:
                raise ValueError(f"Unsupported activation function name {a}")

        # TODO(synk): training-mode dropout (stochastic masking) not implemented;
        # eval / dropout=0.0 identity semantics assumed.
        self.dropout = dropout
        self.tile_m = tile_m
        # NOTE: use_bf16_matmul=True changes numerics (~1e-2 abs tolerance);
        # keep it off on v5e and for strict-tolerance comparisons.
        self.use_bf16_matmul = use_bf16_matmul

        # Activation after hidden layer i only for i < len(hidden_layers)-1
        # (matches DenseNN: last hidden layer and output layer have no activation).
        self.act_names = tuple(
            activations[i] if i < len(hidden_layers) - 1 else None
            for i in range(len(hidden_layers))
        ) + (None,)

        # Deterministic PyTorch-Linear-like uniform fan-in init; weights stored
        # as [in, out] so the kernel computes y = x @ W + b directly.
        dims = [in_features] + list(hidden_layers) + [1]
        n_layers = len(dims) - 1
        key = jax.random.PRNGKey(seed)
        self.params = []      # params fed to the kernel (weights bf16 if flag set)
        self.params_ref = []  # f32 params for the pure-JAX reference
        for i in range(n_layers):
            fan_in, fan_out = dims[i], dims[i + 1]
            key, kw, kb = jax.random.split(key, 3)
            bound = 1.0 / (fan_in ** 0.5)
            w = jax.random.uniform(kw, (fan_in, fan_out), jnp.float32, -bound, bound)
            b = jax.random.uniform(kb, (1, fan_out), jnp.float32, -bound, bound)
            self.params_ref.append((w, b))
            wk = w.astype(jnp.bfloat16) if use_bf16_matmul else w  # pre-cast once
            self.params.append((wk, b))

    def __call__(self, x):
        return fused_dense_forward(
            x, self.params, self.act_names,
            tile_m=self.tile_m, use_bf16_matmul=self.use_bf16_matmul)


if __name__ == "__main__":
    # Small shapes consistent with the module: in_features=16, hidden=[32, 32],
    # output=1. batch=200 is not a multiple of 8*... anything fancy; with the
    # new tile selection it runs as a single 200-row grid step.
    key = jax.random.PRNGKey(0)
    batch, in_features = 200, 16
    x = jax.random.normal(key, (batch, in_features), jnp.float32)

    model = DenseNNPallas(in_features=in_features,
                          hidden_layers=[32, 32],
                          activations="ReLU",
                          dropout=0.0,
                          seed=0)

    out = jax.block_until_ready(model(x))

    # Pure-JAX reference (f32 params).
    ref = x
    for (w, b), act in zip(model.params_ref, model.act_names):
        ref = ref @ w + b
        if act is not None:
            ref = _ACT_FNS[act](ref)

    assert out.shape == (batch, 1), out.shape
    assert jnp.allclose(out, ref, atol=1e-5, rtol=1e-5), "mismatch vs reference"

    print("KERNEL_OK")
</pallas_src>

<mosaic_0001>
module attributes {stable_mosaic.version = 11 : i64} {
  func.func @_fused_mlp_kernel(%arg0: i32, %arg1: memref<200x16xf32, #tpu.memory_space<vmem>>, %arg2: memref<16x32xf32, #tpu.memory_space<vmem>>, %arg3: memref<1x32xf32, #tpu.memory_space<vmem>>, %arg4: memref<32x32xf32, #tpu.memory_space<vmem>>, %arg5: memref<1x32xf32, #tpu.memory_space<vmem>>, %arg6: memref<32x1xf32, #tpu.memory_space<vmem>>, %arg7: memref<1x1xf32, #tpu.memory_space<vmem>>, %arg8: memref<200x1xf32, #tpu.memory_space<vmem>>) attributes {dimension_semantics = [#tpu.dimension_semantics<parallel>], iteration_bounds = array<i64: 1>, scalar_prefetch = 0 : i64, scratch_operands = 0 : i64, tpu.core_type = #tpu.core_type<tc>, window_params = [{transform_indices = @transform_0, window_bounds = array<i64: 200, 16>}, {pipeline_mode = #tpu.pipeline_mode<synchronous>, transform_indices = @transform_1, window_bounds = array<i64: 16, 32>}, {pipeline_mode = #tpu.pipeline_mode<synchronous>, transform_indices = @transform_2, window_bounds = array<i64: 1, 32>}, {pipeline_mode = #tpu.pipeline_mode<synchronous>, transform_indices = @transform_3, window_bounds = array<i64: 32, 32>}, {pipeline_mode = #tpu.pipeline_mode<synchronous>, transform_indices = @transform_4, window_bounds = array<i64: 1, 32>}, {pipeline_mode = #tpu.pipeline_mode<synchronous>, transform_indices = @transform_5, window_bounds = array<i64: 32, 1>}, {pipeline_mode = #tpu.pipeline_mode<synchronous>, transform_indices = @transform_6, window_bounds = array<i64: 1, 1>}, {transform_indices = @transform_7, window_bounds = array<i64: 200, 1>}]} {
    %c0 = arith.constant 0 : index
    %c0_0 = arith.constant 0 : index
    %0 = vector.load %arg1[%c0, %c0_0] : memref<200x16xf32, #tpu.memory_space<vmem>>, vector<200x16xf32>
    %c0_1 = arith.constant 0 : index
    %c0_2 = arith.constant 0 : index
    %1 = vector.load %arg2[%c0_1, %c0_2] : memref<16x32xf32, #tpu.memory_space<vmem>>, vector<16x32xf32>
    %c0_3 = arith.constant 0 : index
    %c0_4 = arith.constant 0 : index
    %2 = vector.load %arg3[%c0_3, %c0_4] : memref<1x32xf32, #tpu.memory_space<vmem>>, vector<1x32xf32>
    %cst = arith.constant dense<0.000000e+00> : vector<200x32xf32>
    %3 = tpu.matmul %0, %1, %cst {dimension_numbers = #tpu.dot_dimension_numbers<[1], [0], [0], [1], [0, 0, 1, 1], [], []>} : vector<200x16xf32>, vector<16x32xf32>, vector<200x32xf32> -> vector<200x32xf32>
    %4 = vector.broadcast %2 : vector<1x32xf32> to vector<200x32xf32>
    %5 = arith.addf %3, %4 : vector<200x32xf32>
    %cst_5 = arith.constant 0.000000e+00 : f32
    %6 = vector.broadcast %cst_5 : f32 to vector<200x32xf32>
    %7 = arith.maximumf %5, %6 : vector<200x32xf32>
    %c0_6 = arith.constant 0 : index
    %c0_7 = arith.constant 0 : index
    %8 = vector.load %arg4[%c0_6, %c0_7] : memref<32x32xf32, #tpu.memory_space<vmem>>, vector<32x32xf32>
    %c0_8 = arith.constant 0 : index
    %c0_9 = arith.constant 0 : index
    %9 = vector.load %arg5[%c0_8, %c0_9] : memref<1x32xf32, #tpu.memory_space<vmem>>, vector<1x32xf32>
    %cst_10 = arith.constant dense<0.000000e+00> : vector<200x32xf32>
    %10 = tpu.matmul %7, %8, %cst_10 {dimension_numbers = #tpu.dot_dimension_numbers<[1], [0], [0], [1], [0, 0, 1, 1], [], []>} : vector<200x32xf32>, vector<32x32xf32>, vector<200x32xf32> -> vector<200x32xf32>
    %11 = vector.broadcast %9 : vector<1x32xf32> to vector<200x32xf32>
    %12 = arith.addf %10, %11 : vector<200x32xf32>
    %c0_11 = arith.constant 0 : index
    %c0_12 = arith.constant 0 : index
    %13 = vector.load %arg6[%c0_11, %c0_12] : memref<32x1xf32, #tpu.memory_space<vmem>>, vector<32x1xf32>
    %c0_13 = arith.constant 0 : index
    %c0_14 = arith.constant 0 : index
    %14 = vector.load %arg7[%c0_13, %c0_14] : memref<1x1xf32, #tpu.memory_space<vmem>>, vector<1x1xf32>
    %cst_15 = arith.constant dense<0.000000e+00> : vector<200x1xf32>
    %15 = tpu.matmul %12, %13, %cst_15 {dimension_numbers = #tpu.dot_dimension_numbers<[1], [0], [0], [1], [0, 0, 1, 1], [], []>} : vector<200x32xf32>, vector<32x1xf32>, vector<200x1xf32> -> vector<200x1xf32>
    %16 = vector.broadcast %14 : vector<1x1xf32> to vector<200x1xf32>
    %17 = arith.addf %15, %16 : vector<200x1xf32>
    %c0_16 = arith.constant 0 : index
    %c0_17 = arith.constant 0 : index
    %18 = vector.load %arg8[%c0_16, %c0_17] : memref<200x1xf32, #tpu.memory_space<vmem>>, vector<200x1xf32>
    tpu.vector_store %arg8[%c0_16, %c0_17], %17 {strides = array<i32>} : memref<200x1xf32, #tpu.memory_space<vmem>>, vector<200x1xf32>,
    return
  }
  func.func @transform_0(%arg0: i32) -> (i32, i32) {
    %c0_i32 = arith.constant 0 : i32
    %c0_i32_0 = arith.constant 0 : i32
    return %arg0, %c0_i32 : i32, i32
  }
  func.func @transform_1(%arg0: i32) -> (i32, i32) {
    %c0_i32 = arith.constant 0 : i32
    %c0_i32_0 = arith.constant 0 : i32
    %c0_i32_1 = arith.constant 0 : i32
    return %c0_i32, %c0_i32_0 : i32, i32
  }
  func.func @transform_2(%arg0: i32) -> (i32, i32) {
    %c0_i32 = arith.constant 0 : i32
    %c0_i32_0 = arith.constant 0 : i32
    %c0_i32_1 = arith.constant 0 : i32
    return %c0_i32, %c0_i32_0 : i32, i32
  }
  func.func @transform_3(%arg0: i32) -> (i32, i32) {
    %c0_i32 = arith.constant 0 : i32
    %c0_i32_0 = arith.constant 0 : i32
    %c0_i32_1 = arith.constant 0 : i32
    return %c0_i32, %c0_i32_0 : i32, i32
  }
  func.func @transform_4(%arg0: i32) -> (i32, i32) {
    %c0_i32 = arith.constant 0 : i32
    %c0_i32_0 = arith.constant 0 : i32
    %c0_i32_1 = arith.constant 0 : i32
    return %c0_i32, %c0_i32_0 : i32, i32
  }
  func.func @transform_5(%arg0: i32) -> (i32, i32) {
    %c0_i32 = arith.constant 0 : i32
    %c0_i32_0 = arith.constant 0 : i32
    %c0_i32_1 = arith.constant 0 : i32
    return %c0_i32, %c0_i32_0 : i32, i32
  }
  func.func @transform_6(%arg0: i32) -> (i32, i32) {
    %c0_i32 = arith.constant 0 : i32
    %c0_i32_0 = arith.constant 0 : i32
    %c0_i32_1 = arith.constant 0 : i32
    return %c0_i32, %c0_i32_0 : i32, i32
  }
  func.func @transform_7(%arg0: i32) -> (i32, i32) {
    %c0_i32 = arith.constant 0 : i32
    %c0_i32_0 = arith.constant 0 : i32
    return %arg0, %c0_i32 : i32, i32
  }
}

</mosaic_0001>

<llo_original>
// kernel: tpu_custom_call.1
$region0: #{tpu_custom_call.1}
  #allocation0 [shape = 'u32[]', space=smem, size = 0x4, offset = 0x4, fixed_abs, tag = 'smem constant byte address 0x4 - core index']
  #allocation1 [shape = 'u32[72,128]{1,0:T(1,128)}', space=vmem, size = 0x9000, scoped, tag = 'internal scratch']
  #allocation2 [shape = 'f32[1,1]{1,0:T(1,128)S(1)}', space=vmem, size = 0x200, scoped, tag = 'scoped memory for tpu_custom_call.1']
  %s0 = inlined_call_operand.vmem [shape: f32[200,16], index: 0, kind: input, shape index: {}]
  %s1 = inlined_call_operand.vmem [shape: f32[16,32], index: 1, kind: input, shape index: {}]
  %s2 = inlined_call_operand.vmem [shape: f32[1,32], index: 2, kind: input, shape index: {}]
  %s3 = inlined_call_operand.vmem [shape: f32[32,32], index: 3, kind: input, shape index: {}]
  %s4 = inlined_call_operand.vmem [shape: f32[1,32], index: 4, kind: input, shape index: {}]
  %s5 = inlined_call_operand.vmem [shape: f32[32,1], index: 5, kind: input, shape index: {}]
  %s6 = inlined_call_operand.<no memory space> [shape: f32[1,1], index: 6, kind: input, shape index: {}]
  %s7 = inlined_call_operand.vmem [shape: f32[200,1], index: 7, kind: output, shape index: {}]
  %s8 = sld [smem:[#allocation0]]
  $region38: #{tpu_custom_call.1} parent=0
    _
  %s10 = ssub.s32 1, %s8
  %s11 = scalar_select 0, %s10, %s8
  %v12 = vstv %s6
  %13 = vst [vmem:[#allocation2] sm:$0x1] %v12
  // Predicated region
  $region2: #{tpu_custom_call.1} parent=0 // pred_check
    _
  $region3: #{tpu_custom_call.1} parent=0 // pred_check_branch
    %15 = sbr.rel (0) target = $region5
  $region4: #{tpu_custom_call.1} parent=0 // pred_region
    _
  $region5: #{tpu_custom_call.1} parent=0 // pred_fallthru
    _
  // Predicated region
  $region6: #{tpu_custom_call.1} parent=0 // pred_check
    _
  $region7: #{tpu_custom_call.1} parent=0 // pred_check_branch
    %17 = sbr.rel (0) target = $region9
  $region8: #{tpu_custom_call.1} parent=0 // pred_region
    _
  $region9: #{tpu_custom_call.1} parent=0 // pred_fallthru
    _
  // Predicated region
  $region10: #{tpu_custom_call.1} parent=0 // pred_check
    _
  $region11: #{tpu_custom_call.1} parent=0 // pred_check_branch
    %19 = sbr.rel (0) target = $region13
  $region12: #{tpu_custom_call.1} parent=0 // pred_region
    _
  $region13: #{tpu_custom_call.1} parent=0 // pred_fallthru
    _
  // Predicated region
  $region14: #{tpu_custom_call.1} parent=0 // pred_check
    _
  $region15: #{tpu_custom_call.1} parent=0 // pred_check_branch
    %21 = sbr.rel (0) target = $region17
  $region16: #{tpu_custom_call.1} parent=0 // pred_region
    _
  $region17: #{tpu_custom_call.1} parent=0 // pred_fallthru
    _
  // Predicated region
  $region18: #{tpu_custom_call.1} parent=0 // pred_check
    _
  $region19: #{tpu_custom_call.1} parent=0 // pred_check_branch
    %23 = sbr.rel (0) target = $region21
  $region20: #{tpu_custom_call.1} parent=0 // pred_region
    _
  $region21: #{tpu_custom_call.1} parent=0 // pred_fallthru
    _
  // Predicated region
  $region22: #{tpu_custom_call.1} parent=0 // pred_check
    _
  $region23: #{tpu_custom_call.1} parent=0 // pred_check_branch
    %25 = sbr.rel (0) target = $region25
  $region24: #{tpu_custom_call.1} parent=0 // pred_region
    _
  $region25: #{tpu_custom_call.1} parent=0 // pred_fallthru
    _
  // Predicated region
  $region26: #{tpu_custom_call.1} parent=0 // pred_check
    _
  $region27: #{tpu_custom_call.1} parent=0 // pred_check_branch
    %27 = sbr.rel (0) target = $region29
  $region28: #{tpu_custom_call.1} parent=0 // pred_region
    _
  $region29: #{tpu_custom_call.1} parent=0 // pred_fallthru
    _
  %v28 = vld [vmem:[%s0] sm:$0xff]
  %v29 = vld [vmem:[%s0 + $0x8] sm:$0xff]
  %v30 = vld [vmem:[%s0 + $0x10] sm:$0xff]
  %v31 = vld [vmem:[%s0 + $0x18] sm:$0xff]
  %v32 = vld [vmem:[%s0 + $0x20] sm:$0xff]
  %v33 = vld [vmem:[%s0 + $0x28] sm:$0xff]
  %v34 = vld [vmem:[%s0 + $0x30] sm:$0xff]
  %v35 = vld [vmem:[%s0 + $0x38] sm:$0xff]
  %v36 = vld [vmem:[%s0 + $0x40] sm:$0xff]
  %v37 = vld [vmem:[%s0 + $0x48] sm:$0xff]
  %v38 = vld [vmem:[%s0 + $0x50] sm:$0xff]
  %v39 = vld [vmem:[%s0 + $0x58] sm:$0xff]
  %v40 = vld [vmem:[%s0 + $0x60] sm:$0xff]
  %v41 = vld [vmem:[%s0 + $0x68] sm:$0xff]
  %v42 = vld [vmem:[%s0 + $0x70] sm:$0xff]
  %v43 = vld [vmem:[%s0 + $0x78] sm:$0xff]
  %v44 = vld [vmem:[%s0 + $0x80] sm:$0xff]
  %v45 = vld [vmem:[%s0 + $0x88] sm:$0xff]
  %v46 = vld [vmem:[%s0 + $0x90] sm:$0xff]
  %v47 = vld [vmem:[%s0 + $0x98] sm:$0xff]
  %v48 = vld [vmem:[%s0 + $0xa0] sm:$0xff]
  %v49 = vld [vmem:[%s0 + $0xa8] sm:$0xff]
  %v50 = vld [vmem:[%s0 + $0xb0] sm:$0xff]
  %v51 = vld [vmem:[%s0 + $0xb8] sm:$0xff]
  %v52 = vld [vmem:[%s0 + $0xc0] sm:$0xff]
  %v53 = vld [vmem:[%s1] sm:$0xff]
  %v54 = vld [vmem:[%s1 + $0x8] sm:$0xff]
  %v55 = vld [vmem:[%s2] sm:$0x1]
  %v57 = vperm.slane %v55, 0
  %vm59 = vcmask 130048
  %v61 = vsel %vm59, %v28, 0
  %v64 = vsel %vm59, %v29, 0
  %v67 = vsel %vm59, %v30, 0
  %v70 = vsel %vm59, %v31, 0
  %v73 = vsel %vm59, %v32, 0
  %v76 = vsel %vm59, %v33, 0
  %v79 = vsel %vm59, %v34, 0
  %v82 = vsel %vm59, %v35, 0
  %v85 = vsel %vm59, %v36, 0
  %v88 = vsel %vm59, %v37, 0
  %v91 = vsel %vm59, %v38, 0
  %v94 = vsel %vm59, %v39, 0
  %v97 = vsel %vm59, %v40, 0
  %v100 = vsel %vm59, %v41, 0
  %v103 = vsel %vm59, %v42, 0
  %v106 = vsel %vm59, %v43, 0
  %v109 = vsel %vm59, %v44, 0
  %v112 = vsel %vm59, %v45, 0
  %v115 = vsel %vm59, %v46, 0
  %v118 = vsel %vm59, %v47, 0
  %v121 = vsel %vm59, %v48, 0
  %v124 = vsel %vm59, %v49, 0
  %v127 = vsel %vm59, %v50, 0
  %v130 = vsel %vm59, %v51, 0
  %v133 = vsel %vm59, %v52, 0
  %135 = vmatpush.msra.mxu0 0.0
  %136 = vmatpush.msra.mxu0 0.0
  %137 = vmatpush.msra.mxu0 0.0
  %138 = vmatpush.msra.mxu0 0.0
  %139 = vmatpush.msra.mxu0 0.0
  %140 = vmatpush.msra.mxu0 0.0
  %141 = vmatpush.msra.mxu0 0.0
  %142 = vmatpush.msra.mxu0 0.0
  %143 = vmatpush.msra.mxu0 0.0
  %144 = vmatpush.msra.mxu0 0.0
  %145 = vmatpush.msra.mxu0 0.0
  %146 = vmatpush.msra.mxu0 0.0
  %147 = vmatpush.msra.mxu0 0.0
  %148 = vmatpush.msra.mxu0 0.0
  %149 = vmatpush.msra.mxu0 %v54
  %150 = vmatpush.msra.mxu0 %v53
  %151 = vmatmul.f32.gmra.mxu0 %v61
  %v152 = vpop.f32.mrf.mxu0
  %v153 = vadd.f32 %v57, %v152
  %154 = vmatmul.f32.gmra.mxu0 %v64
  %v155 = vpop.f32.mrf.mxu0
  %v156 = vadd.f32 %v57, %v155
  %157 = vmatmul.f32.gmra.mxu0 %v67
  %v158 = vpop.f32.mrf.mxu0
  %v159 = vadd.f32 %v57, %v158
  %160 = vmatmul.f32.gmra.mxu0 %v70
  %v161 = vpop.f32.mrf.mxu0
  %v162 = vadd.f32 %v57, %v161
  %163 = vmatmul.f32.gmra.mxu0 %v73
  %v164 = vpop.f32.mrf.mxu0
  %v165 = vadd.f32 %v57, %v164
  %166 = vmatmul.f32.gmra.mxu0 %v76
  %v167 = vpop.f32.mrf.mxu0
  %v168 = vadd.f32 %v57, %v167
  %169 = vmatmul.f32.gmra.mxu0 %v79
  %v170 = vpop.f32.mrf.mxu0
  %v171 = vadd.f32 %v57, %v170
  %172 = vmatmul.f32.gmra.mxu0 %v82
  %v173 = vpop.f32.mrf.mxu0
  %v174 = vadd.f32 %v57, %v173
  %175 = vmatmul.f32.gmra.mxu0 %v85
  %v176 = vpop.f32.mrf.mxu0
  %v177 = vadd.f32 %v57, %v176
  %178 = vmatmul.f32.gmra.mxu0 %v88
  %v179 = vpop.f32.mrf.mxu0
  %v180 = vadd.f32 %v57, %v179
  %181 = vmatmul.f32.gmra.mxu0 %v91
  %v182 = vpop.f32.mrf.mxu0
  %v183 = vadd.f32 %v57, %v182
  %184 = vmatmul.f32.gmra.mxu0 %v94
  %v185 = vpop.f32.mrf.mxu0
  %v186 = vadd.f32 %v57, %v185
  %187 = vmatmul.f32.gmra.mxu0 %v97
  %v188 = vpop.f32.mrf.mxu0
  %v189 = vadd.f32 %v57, %v188
  %190 = vmatmul.f32.gmra.mxu0 %v100
  %v191 = vpop.f32.mrf.mxu0
  %v192 = vadd.f32 %v57, %v191
  %193 = vmatmul.f32.gmra.mxu0 %v103
  %v194 = vpop.f32.mrf.mxu0
  %v195 = vadd.f32 %v57, %v194
  %196 = vmatmul.f32.gmra.mxu0 %v106
  %v197 = vpop.f32.mrf.mxu0
  %v198 = vadd.f32 %v57, %v197
  %199 = vmatmul.f32.gmra.mxu0 %v109
  %v200 = vpop.f32.mrf.mxu0
  %v201 = vadd.f32 %v57, %v200
  %202 = vmatmul.f32.gmra.mxu0 %v112
  %v203 = vpop.f32.mrf.mxu0
  %v204 = vadd.f32 %v57, %v203
  %205 = vmatmul.f32.gmra.mxu0 %v115
  %v206 = vpop.f32.mrf.mxu0
  %v207 = vadd.f32 %v57, %v206
  %208 = vmatmul.f32.gmra.mxu0 %v118
  %v209 = vpop.f32.mrf.mxu0
  %v210 = vadd.f32 %v57, %v209
  %211 = vmatmul.f32.gmra.mxu0 %v121
  %v212 = vpop.f32.mrf.mxu0
  %v213 = vadd.f32 %v57, %v212
  %214 = vmatmul.f32.gmra.mxu0 %v124
  %v215 = vpop.f32.mrf.mxu0
  %v216 = vadd.f32 %v57, %v215
  %217 = vmatmul.f32.gmra.mxu0 %v127
  %v218 = vpop.f32.mrf.mxu0
  %v219 = vadd.f32 %v57, %v218
  %220 = vmatmul.f32.gmra.mxu0 %v130
  %v221 = vpop.f32.mrf.mxu0
  %v222 = vadd.f32 %v57, %v221
  %223 = vmatmul.f32.gmra.mxu0 %v133
  %v224 = vpop.f32.mrf.mxu0
  %v225 = vadd.f32 %v57, %v224
  %226 = vdwg.mxu0
  %v227 = vmax.f32 %v153, 0.0
  %v228 = vmax.f32 %v156, 0.0
  %v229 = vmax.f32 %v159, 0.0
  %v230 = vmax.f32 %v162, 0.0
  %v231 = vmax.f32 %v165, 0.0
  %v232 = vmax.f32 %v168, 0.0
  %v233 = vmax.f32 %v171, 0.0
  %v234 = vmax.f32 %v174, 0.0
  %v235 = vmax.f32 %v177, 0.0
  %v236 = vmax.f32 %v180, 0.0
  %v237 = vmax.f32 %v183, 0.0
  %v238 = vmax.f32 %v186, 0.0
  %v239 = vmax.f32 %v189, 0.0
  %v240 = vmax.f32 %v192, 0.0
  %v241 = vmax.f32 %v195, 0.0
  %v242 = vmax.f32 %v198, 0.0
  %v243 = vmax.f32 %v201, 0.0
  %v244 = vmax.f32 %v204, 0.0
  %v245 = vmax.f32 %v207, 0.0
  %v246 = vmax.f32 %v210, 0.0
  %v247 = vmax.f32 %v213, 0.0
  %v248 = vmax.f32 %v216, 0.0
  %v249 = vmax.f32 %v219, 0.0
  %v250 = vmax.f32 %v222, 0.0
  %v251 = vmax.f32 %v225, 0.0
  %v252 = vld [vmem:[%s3] sm:$0xff]
  %v253 = vld [vmem:[%s3 + $0x8] sm:$0xff]
  %v254 = vld [vmem:[%s3 + $0x10] sm:$0xff]
  %v255 = vld [vmem:[%s3 + $0x18] sm:$0xff]
  %v256 = vld [vmem:[%s4] sm:$0x1]
  %v258 = vperm.slane %v256, 0
  %vm260 = vcmask 261120
  %v262 = vsel %vm260, %v227, 0
  %v265 = vsel %vm260, %v228, 0
  %v268 = vsel %vm260, %v229, 0
  %v271 = vsel %vm260, %v230, 0
  %v274 = vsel %vm260, %v231, 0
  %v277 = vsel %vm260, %v232, 0
  %v280 = vsel %vm260, %v233, 0
  %v283 = vsel %vm260, %v234, 0
  %v286 = vsel %vm260, %v235, 0
  %v289 = vsel %vm260, %v236, 0
  %v292 = vsel %vm260, %v237, 0
  %v295 = vsel %vm260, %v238, 0
  %v298 = vsel %vm260, %v239, 0
  %v301 = vsel %vm260, %v240, 0
  %v304 = vsel %vm260, %v241, 0
  %v307 = vsel %vm260, %v242, 0
  %v310 = vsel %vm260, %v243, 0
  %v313 = vsel %vm260, %v244, 0
  %v316 = vsel %vm260, %v245, 0
  %v319 = vsel %vm260, %v246, 0
  %v322 = vsel %vm260, %v247, 0
  %v325 = vsel %vm260, %v248, 0
  %v328 = vsel %vm260, %v249, 0
  %v331 = vsel %vm260, %v250, 0
  %v334 = vsel %vm260, %v251, 0
  %336 = vmatpush.msra.mxu0 0.0
  %337 = vmatpush.msra.mxu0 0.0
  %338 = vmatpush.msra.mxu0 0.0
  %339 = vmatpush.msra.mxu0 0.0
  %340 = vmatpush.msra.mxu0 0.0
  %341 = vmatpush.msra.mxu0 0.0
  %342 = vmatpush.msra.mxu0 0.0
  %343 = vmatpush.msra.mxu0 0.0
  %344 = vmatpush.msra.mxu0 0.0
  %345 = vmatpush.msra.mxu0 0.0
  %346 = vmatpush.msra.mxu0 0.0
  %347 = vmatpush.msra.mxu0 0.0
  %348 = vmatpush.msra.mxu0 %v255
  %349 = vmatpush.msra.mxu0 %v254
  %350 = vmatpush.msra.mxu0 %v253
  %351 = vmatpush.msra.mxu0 %v252
  %352 = vmatmul.f32.gmra.mxu0 %v262
  %v353 = vpop.f32.mrf.mxu0
  %v354 = vadd.f32 %v258, %v353
  %355 = vmatmul.f32.gmra.mxu0 %v265
  %v356 = vpop.f32.mrf.mxu0
  %v357 = vadd.f32 %v258, %v356
  %358 = vmatmul.f32.gmra.mxu0 %v268
  %v359 = vpop.f32.mrf.mxu0
  %v360 = vadd.f32 %v258, %v359
  %361 = vmatmul.f32.gmra.mxu0 %v271
  %v362 = vpop.f32.mrf.mxu0
  %v363 = vadd.f32 %v258, %v362
  %364 = vmatmul.f32.gmra.mxu0 %v274
  %v365 = vpop.f32.mrf.mxu0
  %v366 = vadd.f32 %v258, %v365
  %367 = vmatmul.f32.gmra.mxu0 %v277
  %v368 = vpop.f32.mrf.mxu0
  %v369 = vadd.f32 %v258, %v368
  %370 = vmatmul.f32.gmra.mxu0 %v280
  %v371 = vpop.f32.mrf.mxu0
  %v372 = vadd.f32 %v258, %v371
  %373 = vmatmul.f32.gmra.mxu0 %v283
  %v374 = vpop.f32.mrf.mxu0
  %v375 = vadd.f32 %v258, %v374
  %376 = vmatmul.f32.gmra.mxu0 %v286
  %v377 = vpop.f32.mrf.mxu0
  %v378 = vadd.f32 %v258, %v377
  %379 = vmatmul.f32.gmra.mxu0 %v289
  %v380 = vpop.f32.mrf.mxu0
  %v381 = vadd.f32 %v258, %v380
  %382 = vmatmul.f32.gmra.mxu0 %v292
  %v383 = vpop.f32.mrf.mxu0
  %v384 = vadd.f32 %v258, %v383
  %385 = vmatmul.f32.gmra.mxu0 %v295
  %v386 = vpop.f32.mrf.mxu0
  %v387 = vadd.f32 %v258, %v386
  %388 = vmatmul.f32.gmra.mxu0 %v298
  %v389 = vpop.f32.mrf.mxu0
  %v390 = vadd.f32 %v258, %v389
  %391 = vmatmul.f32.gmra.mxu0 %v301
  %v392 = vpop.f32.mrf.mxu0
  %v393 = vadd.f32 %v258, %v392
  %394 = vmatmul.f32.gmra.mxu0 %v304
  %v395 = vpop.f32.mrf.mxu0
  %v396 = vadd.f32 %v258, %v395
  %397 = vmatmul.f32.gmra.mxu0 %v307
  %v398 = vpop.f32.mrf.mxu0
  %v399 = vadd.f32 %v258, %v398
  %400 = vmatmul.f32.gmra.mxu0 %v310
  %v401 = vpop.f32.mrf.mxu0
  %v402 = vadd.f32 %v258, %v401
  %403 = vmatmul.f32.gmra.mxu0 %v313
  %v404 = vpop.f32.mrf.mxu0
  %v405 = vadd.f32 %v258, %v404
  %406 = vmatmul.f32.gmra.mxu0 %v316
  %v407 = vpop.f32.mrf.mxu0
  %v408 = vadd.f32 %v258, %v407
  %409 = vmatmul.f32.gmra.mxu0 %v319
  %v410 = vpop.f32.mrf.mxu0
  %v411 = vadd.f32 %v258, %v410
  %412 = vmatmul.f32.gmra.mxu0 %v322
  %v413 = vpop.f32.mrf.mxu0
  %v414 = vadd.f32 %v258, %v413
  %415 = vmatmul.f32.gmra.mxu0 %v325
  %v416 = vpop.f32.mrf.mxu0
  %v417 = vadd.f32 %v258, %v416
  %418 = vmatmul.f32.gmra.mxu0 %v328
  %v419 = vpop.f32.mrf.mxu0
  %v420 = vadd.f32 %v258, %v419
  %421 = vmatmul.f32.gmra.mxu0 %v331
  %v422 = vpop.f32.mrf.mxu0
  %v423 = vadd.f32 %v258, %v422
  %424 = vmatmul.f32.gmra.mxu0 %v334
  %v425 = vpop.f32.mrf.mxu0
  %v426 = vadd.f32 %v258, %v425
  %427 = vdwg.mxu0
  %v428 = vld [vmem:[%s5] sm:$0xff]
  %v429 = vld [vmem:[%s5 + $0x8] sm:$0xff]
  %v430 = vld [vmem:[%s5 + $0x10] sm:$0xff]
  %v431 = vld [vmem:[%s5 + $0x18] sm:$0xff]
  %v432 = vld [vmem:[#allocation2] sm:$0x1]
  %v434 = vperm.slane %v432, 0
  %v437 = vsel %vm260, %v354, 0
  %v440 = vsel %vm260, %v357, 0
  %v443 = vsel %vm260, %v360, 0
  %v446 = vsel %vm260, %v363, 0
  %v449 = vsel %vm260, %v366, 0
  %v452 = vsel %vm260, %v369, 0
  %v455 = vsel %vm260, %v372, 0
  %v458 = vsel %vm260, %v375, 0
  %v461 = vsel %vm260, %v378, 0
  %v464 = vsel %vm260, %v381, 0
  %v467 = vsel %vm260, %v384, 0
  %v470 = vsel %vm260, %v387, 0
  %v473 = vsel %vm260, %v390, 0
  %v476 = vsel %vm260, %v393, 0
  %v479 = vsel %vm260, %v396, 0
  %v482 = vsel %vm260, %v399, 0
  %v485 = vsel %vm260, %v402, 0
  %v488 = vsel %vm260, %v405, 0
  %v491 = vsel %vm260, %v408, 0
  %v494 = vsel %vm260, %v411, 0
  %v497 = vsel %vm260, %v414, 0
  %v500 = vsel %vm260, %v417, 0
  %v503 = vsel %vm260, %v420, 0
  %v506 = vsel %vm260, %v423, 0
  %v509 = vsel %vm260, %v426, 0
  %511 = vmatpush.msra.mxu0 0.0
  %512 = vmatpush.msra.mxu0 0.0
  %513 = vmatpush.msra.mxu0 0.0
  %514 = vmatpush.msra.mxu0 0.0
  %515 = vmatpush.msra.mxu0 0.0
  %516 = vmatpush.msra.mxu0 0.0
  %517 = vmatpush.msra.mxu0 0.0
  %518 = vmatpush.msra.mxu0 0.0
  %519 = vmatpush.msra.mxu0 0.0
  %520 = vmatpush.msra.mxu0 0.0
  %521 = vmatpush.msra.mxu0 0.0
  %522 = vmatpush.msra.mxu0 0.0
  %523 = vmatpush.msra.mxu0 %v431
  %524 = vmatpush.msra.mxu0 %v430
  %525 = vmatpush.msra.mxu0 %v429
  %526 = vmatpush.msra.mxu0 %v428
  %527 = vmatmul.f32.gmra.mxu0 %v437
  %v528 = vpop.f32.mrf.mxu0
  %v529 = vadd.f32 %v434, %v528
  %530 = vmatmul.f32.gmra.mxu0 %v440
  %v531 = vpop.f32.mrf.mxu0
  %v532 = vadd.f32 %v434, %v531
  %533 = vmatmul.f32.gmra.mxu0 %v443
  %v534 = vpop.f32.mrf.mxu0
  %v535 = vadd.f32 %v434, %v534
  %536 = vmatmul.f32.gmra.mxu0 %v446
  %v537 = vpop.f32.mrf.mxu0
  %v538 = vadd.f32 %v434, %v537
  %539 = vmatmul.f32.gmra.mxu0 %v449
  %v540 = vpop.f32.mrf.mxu0
  %v541 = vadd.f32 %v434, %v540
  %542 = vmatmul.f32.gmra.mxu0 %v452
  %v543 = vpop.f32.mrf.mxu0
  %v544 = vadd.f32 %v434, %v543
  %545 = vmatmul.f32.gmra.mxu0 %v455
  %v546 = vpop.f32.mrf.mxu0
  %v547 = vadd.f32 %v434, %v546
  %548 = vmatmul.f32.gmra.mxu0 %v458
  %v549 = vpop.f32.mrf.mxu0
  %v550 = vadd.f32 %v434, %v549
  %551 = vmatmul.f32.gmra.mxu0 %v461
  %v552 = vpop.f32.mrf.mxu0
  %v553 = vadd.f32 %v434, %v552
  %554 = vmatmul.f32.gmra.mxu0 %v464
  %v555 = vpop.f32.mrf.mxu0
  %v556 = vadd.f32 %v434, %v555
  %557 = vmatmul.f32.gmra.mxu0 %v467
  %v558 = vpop.f32.mrf.mxu0
  %v559 = vadd.f32 %v434, %v558
  %560 = vmatmul.f32.gmra.mxu0 %v470
  %v561 = vpop.f32.mrf.mxu0
  %v562 = vadd.f32 %v434, %v561
  %563 = vmatmul.f32.gmra.mxu0 %v473
  %v564 = vpop.f32.mrf.mxu0
  %v565 = vadd.f32 %v434, %v564
  %566 = vmatmul.f32.gmra.mxu0 %v476
  %v567 = vpop.f32.mrf.mxu0
  %v568 = vadd.f32 %v434, %v567
  %569 = vmatmul.f32.gmra.mxu0 %v479
  %v570 = vpop.f32.mrf.mxu0
  %v571 = vadd.f32 %v434, %v570
  %572 = vmatmul.f32.gmra.mxu0 %v482
  %v573 = vpop.f32.mrf.mxu0
  %v574 = vadd.f32 %v434, %v573
  %575 = vmatmul.f32.gmra.mxu0 %v485
  %v576 = vpop.f32.mrf.mxu0
  %v577 = vadd.f32 %v434, %v576
  %578 = vmatmul.f32.gmra.mxu0 %v488
  %v579 = vpop.f32.mrf.mxu0
  %v580 = vadd.f32 %v434, %v579
  %581 = vmatmul.f32.gmra.mxu0 %v491
  %v582 = vpop.f32.mrf.mxu0
  %v583 = vadd.f32 %v434, %v582
  %584 = vmatmul.f32.gmra.mxu0 %v494
  %v585 = vpop.f32.mrf.mxu0
  %v586 = vadd.f32 %v434, %v585
  %587 = vmatmul.f32.gmra.mxu0 %v497
  %v588 = vpop.f32.mrf.mxu0
  %v589 = vadd.f32 %v434, %v588
  %590 = vmatmul.f32.gmra.mxu0 %v500
  %v591 = vpop.f32.mrf.mxu0
  %v592 = vadd.f32 %v434, %v591
  %593 = vmatmul.f32.gmra.mxu0 %v503
  %v594 = vpop.f32.mrf.mxu0
  %v595 = vadd.f32 %v434, %v594
  %596 = vmatmul.f32.gmra.mxu0 %v506
  %v597 = vpop.f32.mrf.mxu0
  %v598 = vadd.f32 %v434, %v597
  %599 = vmatmul.f32.gmra.mxu0 %v509
  %v600 = vpop.f32.mrf.mxu0
  %v601 = vadd.f32 %v434, %v600
  %602 = vdwg.mxu0
  %vm603 = vcmask 7168
  %604 = vst.msk [vmem:[%s7] sm:$0xff] %vm603, %v529
  %605 = vst.msk [vmem:[%s7 + $0x8] sm:$0xff] %vm603, %v532
  %606 = vst.msk [vmem:[%s7 + $0x10] sm:$0xff] %vm603, %v535
  %607 = vst.msk [vmem:[%s7 + $0x18] sm:$0xff] %vm603, %v538
  %608 = vst.msk [vmem:[%s7 + $0x20] sm:$0xff] %vm603, %v541
  %609 = vst.msk [vmem:[%s7 + $0x28] sm:$0xff] %vm603, %v544
  %610 = vst.msk [vmem:[%s7 + $0x30] sm:$0xff] %vm603, %v547
  %611 = vst.msk [vmem:[%s7 + $0x38] sm:$0xff] %vm603, %v550
  %612 = vst.msk [vmem:[%s7 + $0x40] sm:$0xff] %vm603, %v553
  %613 = vst.msk [vmem:[%s7 + $0x48] sm:$0xff] %vm603, %v556
  %614 = vst.msk [vmem:[%s7 + $0x50] sm:$0xff] %vm603, %v559
  %615 = vst.msk [vmem:[%s7 + $0x58] sm:$0xff] %vm603, %v562
  %616 = vst.msk [vmem:[%s7 + $0x60] sm:$0xff] %vm603, %v565
  %617 = vst.msk [vmem:[%s7 + $0x68] sm:$0xff] %vm603, %v568
  %618 = vst.msk [vmem:[%s7 + $0x70] sm:$0xff] %vm603, %v571
  %619 = vst.msk [vmem:[%s7 + $0x78] sm:$0xff] %vm603, %v574
  %620 = vst.msk [vmem:[%s7 + $0x80] sm:$0xff] %vm603, %v577
  %621 = vst.msk [vmem:[%s7 + $0x88] sm:$0xff] %vm603, %v580
  %622 = vst.msk [vmem:[%s7 + $0x90] sm:$0xff] %vm603, %v583
  %623 = vst.msk [vmem:[%s7 + $0x98] sm:$0xff] %vm603, %v586
  %624 = vst.msk [vmem:[%s7 + $0xa0] sm:$0xff] %vm603, %v589
  %625 = vst.msk [vmem:[%s7 + $0xa8] sm:$0xff] %vm603, %v592
  %626 = vst.msk [vmem:[%s7 + $0xb0] sm:$0xff] %vm603, %v595
  %627 = vst.msk [vmem:[%s7 + $0xb8] sm:$0xff] %vm603, %v598
  %628 = vst.msk [vmem:[%s7 + $0xc0] sm:$0xff] %vm603, %v601
  // Predicated region
  $region30: #{tpu_custom_call.1} parent=0 // pred_check
    _
  $region31: #{tpu_custom_call.1} parent=0 // pred_check_branch
    %630 = sbr.rel (0) target = $region33
  $region32: #{tpu_custom_call.1} parent=0 // pred_region
    _
  $region33: #{tpu_custom_call.1} parent=0 // pred_fallthru
    _
  // Predicated region
  $region34: #{tpu_custom_call.1} parent=0 // pred_check
    _
  $region35: #{tpu_custom_call.1} parent=0 // pred_check_branch
    %632 = sbr.rel (0) target = $region37
  $region36: #{tpu_custom_call.1} parent=0 // pred_region
    _
  $region37: #{tpu_custom_call.1} parent=0 // pred_fallthru
    _

</llo_original>
